<compile_context>
chip_gen: v7x
topology: tpu7x:2x2x1
jax: 0.10.0
libtpu: 0.0.40
codegen_flags: <defaults>
</compile_context>

<pallas_src>
import jax
import jax.numpy as jnp
from jax import lax
from jax.experimental import pallas as pl
from jax.experimental.pallas import tpu as pltpu

# ----- module hyperparameters (defaults of Convolution_module) -----
F1 = 4                    # n_temporal_filters
K1 = 64                   # kernel_length
P1 = 8                    # pool_size1
P2 = 7                    # pool_size2
DM = 2                    # depth_multiplier
C = 22                    # in_channels (EEG electrodes)
F2 = DM * F1              # Filter_Num_2 = 8
K2 = 16                   # kernel_length2
EPS = 1e-5                # BatchNorm eps

B = 2                     # batch
T = 112                   # time samples (112/8 = 14, 14/7 = 2)
T1 = T // P1              # 14
T2 = T1 // P2             # 2

# torch Conv2d padding='same' (even kernel): left=(k-1)//2, right=k//2
PAD1_L, PAD1_R = (K1 - 1) // 2, K1 // 2
PAD2_L, PAD2_R = (K2 - 1) // 2, K2 // 2
TP1 = T + K1 - 1          # 175  padded time for temporal conv
TP2 = T1 + K2 - 1         # 29   padded time for spatial conv

TPAD = 128                # lane-aligned per-filter time width inside the kernel
BC = B * C                # 44   batch-folded rows of the input
BF2 = B * F2              # 16   batch-folded rows of the activations

# aux parameter-pack layout (rows; all offsets multiples of 8)
R_DW = 0                  # rows [  0, 64): 4 x (BF2, BC) block-diag depthwise weights
R_P1 = 64                 # rows [ 64,192): (TPAD, TP2) avg-pool1 matrix (with 'same' pad)
R_P2 = 192                # rows [192,206): (T1, T2)    avg-pool2 matrix
R_B = 208                 # rows [208,224): col 0 = bias2, col 1 = bias3
AUX_R, AUX_C = 224, 64


def _elu(x):
    # clamp the exp argument so the dead branch never overflows
    return jnp.where(x > 0, x, jnp.exp(jnp.minimum(x, 0.0)) - 1.0)


def conv_module_kernel(x_ref, tmat_ref, wspf_ref, aux_ref, out_ref):
    # ---- temporal_conv1 + BN1 scale: single Toeplitz MXU matmul ----
    # (B*C, TP1) @ (TP1, F1*TPAD) -> (B*C, F1*TPAD); columns are (filter, time)
    h1 = jnp.dot(x_ref[...], tmat_ref[...], preferred_element_type=jnp.float32)

    # ---- depth_wise_conv (+ BN1 shift, BN2) as 4 block-diagonal matmuls ----
    # group g contracts channels of column block g; weights already carry s2.
    h2 = jnp.dot(aux_ref[R_DW:R_DW + BF2, 0:BC], h1[:, 0:TPAD],
                 preferred_element_type=jnp.float32)               # (BF2, TPAD)
    for g in range(1, F1):
        h2 = h2 + jnp.dot(aux_ref[R_DW + g * BF2:R_DW + (g + 1) * BF2, 0:BC],
                          h1[:, g * TPAD:(g + 1) * TPAD],
                          preferred_element_type=jnp.float32)
    h2 = h2 + aux_ref[R_B:R_B + BF2, 0:1]                           # fused bias2
    h2 = _elu(h2)                                                   # dropout1 = id

    # ---- average_pool1 fused with the spatial conv's 'same' zero padding ----
    h3p = jnp.dot(h2, aux_ref[R_P1:R_P1 + TPAD, 0:TP2],
                  preferred_element_type=jnp.float32)               # (BF2, TP2)

    # ---- spatial_conv1 (+ BN3 scale) as one fused matmul, K = K2*B*F2 = 256 ----
    stacked = jnp.concatenate([h3p[:, k:k + T1] for k in range(K2)], axis=0)  # (256, T1)
    h4 = jnp.dot(wspf_ref[...], stacked, preferred_element_type=jnp.float32)  # (BF2, T1)
    h4 = h4 + aux_ref[R_B:R_B + BF2, 1:2]                           # BN3 shift
    h4 = _elu(h4)                                                   # dropout2 = id

    # ---- average_pool2 ----
    out_ref[...] = jnp.dot(h4, aux_ref[R_P2:R_P2 + T1, 0:T2],
                           preferred_element_type=jnp.float32)      # (BF2, T2)


@jax.jit
def conv_module_forward(x, kparams):
    tmat, wspf, aux = kparams
    # x: (B, 1, C, T) NCHW like PyTorch; squeeze, 'same'-pad time, fold batch into rows
    xsq = x[:, 0, :, :]                                             # (B, C, T)
    xpad = jnp.pad(xsq, ((0, 0), (0, 0), (PAD1_L, PAD1_R)))         # (B, C, TP1)
    x2d = xpad.reshape(BC, TP1)

    out2d = pl.pallas_call(
        conv_module_kernel,
        out_shape=jax.ShapeDtypeStruct((BF2, T2), jnp.float32),
        grid=(1,),
        in_specs=[
            pl.BlockSpec((BC, TP1), lambda i: (0, 0)),              # x (batch-folded)
            pl.BlockSpec((TP1, F1 * TPAD), lambda i: (0, 0)),       # Toeplitz temporal weights
            pl.BlockSpec((BF2, K2 * BF2), lambda i: (0, 0)),        # fused spatial weights
            pl.BlockSpec((AUX_R, AUX_C), lambda i: (0, 0)),         # packed small params
        ],
        out_specs=pl.BlockSpec((BF2, T2), lambda i: (0, 0)),
        compiler_params=pltpu.CompilerParams(dimension_semantics=("arbitrary",)),
    )(x2d, tmat, wspf, aux)
    return out2d.reshape(B, F2, T2).reshape(B, F2, 1, T2)           # back to NCHW


def init_raw_params(key):
    ks = jax.random.split(key, 15)
    w_temp = 0.1 * jax.random.normal(ks[0], (F1, K1), jnp.float32)
    w_dw = 0.1 * jax.random.normal(ks[1], (F1, DM, C), jnp.float32)   # grouped weights
    w_sp = 0.1 * jax.random.normal(ks[2], (K2, F2, F2), jnp.float32)  # (tap, out, in)

    def bn_affine(kg, kb, km, kv, n):
        gamma = 1.0 + 0.1 * jax.random.normal(kg, (n,), jnp.float32)
        beta = 0.1 * jax.random.normal(kb, (n,), jnp.float32)
        mean = 0.1 * jax.random.normal(km, (n,), jnp.float32)
        var = jax.random.uniform(kv, (n,), jnp.float32, minval=0.5, maxval=1.5)
        scale = gamma / jnp.sqrt(var + EPS)
        shift = beta - mean * scale
        return scale, shift

    s1, b1 = bn_affine(ks[3], ks[4], ks[5], ks[6], F1)
    s2, b2 = bn_affine(ks[7], ks[8], ks[9], ks[10], F2)
    s3, b3 = bn_affine(ks[11], ks[12], ks[13], ks[14], F2)
    return (w_temp, s1, b1, w_dw, s2, b2, w_sp, s3, b3)


def prepare_kernel_params(raw):
    """Host-side fusion of BN affines into conv weights + packing (one-time)."""
    (w_temp, s1, b1, w_dw, s2, b2, w_sp, s3, b3) = raw

    # --- Toeplitz matrix for the temporal conv, BN1 scale folded in ---
    # tmat[p, f*TPAD + t] = s1[f] * w_temp[f, p - t]  for 0<=p-t<K1 and t<T
    p = jnp.arange(TP1)[:, None, None]
    t = jnp.arange(TPAD)[None, None, :]
    tap = p - t
    valid = (t < T) & (tap >= 0) & (tap < K1)
    tap_c = jnp.clip(tap, 0, K1 - 1)
    f_idx = jnp.arange(F1)[None, :, None]
    wv = w_temp[f_idx, tap_c]                                        # (TP1, F1, TPAD)
    tmat = (jnp.where(valid, wv, 0.0) * s1[None, :, None]).reshape(TP1, F1 * TPAD)

    # --- block-diagonal depthwise weights (per group), BN2 scale folded in ---
    eyeB = jnp.eye(B, dtype=jnp.float32)
    w_dw_f2 = w_dw.reshape(F2, C)                                    # row f2 = g*DM + d
    w_dw_s = w_dw_f2 * s2[:, None]
    grp = (jnp.arange(F2)[None, :] // DM == jnp.arange(F1)[:, None]).astype(jnp.float32)
    wg = jnp.einsum('gf,ab,fc->gafbc', grp, eyeB, w_dw_s).reshape(F1 * BF2, BC)

    # fused bias2 = s2*(b1 propagated through depthwise) + b2 ; bias3 = b3
    g_of = jnp.arange(F2) // DM
    bias2 = s2 * b1[g_of] * w_dw_f2.sum(axis=1) + b2                 # (F2,)
    bias2_rows = jnp.tile(bias2, B)                                  # row b*F2+f2
    bias3_rows = jnp.tile(b3, B)

    # --- avg-pool1 matrix with spatial-conv 'same' padding folded in ---
    tt = jnp.arange(TPAD)[:, None]
    qq = jnp.arange(TP2)[None, :]
    tq = qq - PAD2_L
    valid_q = (tq >= 0) & (tq < T1)
    in_win = (tt >= tq * P1) & (tt < (tq + 1) * P1) & (tt < T)
    pool1pad = jnp.where(valid_q & in_win, 1.0 / P1, 0.0).astype(jnp.float32)

    # --- avg-pool2 matrix ---
    t1 = jnp.arange(T1)[:, None]
    uu = jnp.arange(T2)[None, :]
    pool2m = jnp.where((t1 >= uu * P2) & (t1 < (uu + 1) * P2), 1.0 / P2, 0.0).astype(jnp.float32)

    # --- fused spatial-conv weights (BN3 scale folded, batch block-diagonal) ---
    # wspf[b*F2+o, k*BF2 + b*F2 + i] = s3[o] * w_sp[k, o, i]
    w_sp_s = w_sp * s3[None, :, None]
    wspf = jnp.einsum('ab,koi->aokbi', eyeB, w_sp_s).reshape(BF2, K2 * BF2)

    # --- pack small parameters into one buffer (fewer DMA descriptors) ---
    aux = jnp.zeros((AUX_R, AUX_C), jnp.float32)
    aux = aux.at[R_DW:R_DW + F1 * BF2, 0:BC].set(wg)
    aux = aux.at[R_P1:R_P1 + TPAD, 0:TP2].set(pool1pad)
    aux = aux.at[R_P2:R_P2 + T1, 0:T2].set(pool2m)
    aux = aux.at[R_B:R_B + BF2, 0].set(bias2_rows)
    aux = aux.at[R_B:R_B + BF2, 1].set(bias3_rows)

    return (tmat, wspf, aux)


def reference_forward(x, raw):
    """Pure-JAX (XLA conv) reference mirroring the PyTorch forward."""
    (w_temp, s1, b1, w_dw, s2, b2, w_sp, s3, b3) = raw
    dn = ('NCHW', 'OIHW', 'NCHW')
    hp = lax.Precision.HIGHEST
    h = lax.conv_general_dilated(x, w_temp.reshape(F1, 1, 1, K1), (1, 1),
                                 [(0, 0), (PAD1_L, PAD1_R)], dimension_numbers=dn,
                                 precision=hp)
    h = h * s1.reshape(1, F1, 1, 1) + b1.reshape(1, F1, 1, 1)
    w2 = w_dw.reshape(F2, C)[:, None, :, None]                       # (F2, 1, C, 1)
    h = lax.conv_general_dilated(h, w2, (1, 1), [(0, 0), (0, 0)],
                                 dimension_numbers=dn, feature_group_count=F1,
                                 precision=hp)
    h = h * s2.reshape(1, F2, 1, 1) + b2.reshape(1, F2, 1, 1)
    h = jnp.where(h > 0, h, jnp.exp(h) - 1.0)
    h = h.reshape(B, F2, 1, T1, P1).mean(axis=-1)
    w3 = jnp.transpose(w_sp, (1, 2, 0))[:, :, None, :]                # (F2, F2, 1, K2)
    h = lax.conv_general_dilated(h, w3, (1, 1), [(0, 0), (PAD2_L, PAD2_R)],
                                 dimension_numbers=dn, precision=hp)
    h = h * s3.reshape(1, F2, 1, 1) + b3.reshape(1, F2, 1, 1)
    h = jnp.where(h > 0, h, jnp.exp(h) - 1.0)
    h = h.reshape(B, F2, 1, T2, P2).mean(axis=-1)
    return h


if __name__ == "__main__":
    key = jax.random.PRNGKey(0)
    kx, kp = jax.random.split(key)
    raw = init_raw_params(kp)
    kparams = prepare_kernel_params(raw)
    x = jax.random.normal(kx, (B, 1, C, T), jnp.float32)              # NCHW like PyTorch

    out = jax.block_until_ready(conv_module_forward(x, kparams))
    ref = jax.block_until_ready(reference_forward(x, raw))

    assert out.shape == (B, F2, 1, T2), out.shape
    max_err = float(jnp.max(jnp.abs(out - ref)))
    if not jnp.allclose(out, ref, rtol=1e-3, atol=1e-3):
        raise AssertionError(f"Pallas kernel mismatch vs reference, max abs err={max_err}")
    print("KERNEL_OK")
</pallas_src>

<mosaic_0001>
module attributes {stable_mosaic.version = 11 : i64} {
  func.func @conv_module_kernel(%arg0: i32, %arg1: memref<44x175xf32, #tpu.memory_space<vmem>>, %arg2: memref<175x512xf32, #tpu.memory_space<vmem>>, %arg3: memref<16x256xf32, #tpu.memory_space<vmem>>, %arg4: memref<224x64xf32, #tpu.memory_space<vmem>>, %arg5: memref<16x2xf32, #tpu.memory_space<vmem>>) attributes {dimension_semantics = [#tpu.dimension_semantics<arbitrary>], iteration_bounds = array<i64: 1>, scalar_prefetch = 0 : i64, scratch_operands = 0 : i64, tpu.core_type = #tpu.core_type<tc>, window_params = [{pipeline_mode = #tpu.pipeline_mode<synchronous>, transform_indices = @transform_0, window_bounds = array<i64: 44, 175>}, {pipeline_mode = #tpu.pipeline_mode<synchronous>, transform_indices = @transform_1, window_bounds = array<i64: 175, 512>}, {pipeline_mode = #tpu.pipeline_mode<synchronous>, transform_indices = @transform_2, window_bounds = array<i64: 16, 256>}, {pipeline_mode = #tpu.pipeline_mode<synchronous>, transform_indices = @transform_3, window_bounds = array<i64: 224, 64>}, {pipeline_mode = #tpu.pipeline_mode<synchronous>, transform_indices = @transform_4, window_bounds = array<i64: 16, 2>}]} {
    %c0 = arith.constant 0 : index
    %c0_0 = arith.constant 0 : index
    %0 = vector.load %arg1[%c0, %c0_0] : memref<44x175xf32, #tpu.memory_space<vmem>>, vector<44x175xf32>
    %c0_1 = arith.constant 0 : index
    %c0_2 = arith.constant 0 : index
    %1 = vector.load %arg2[%c0_1, %c0_2] : memref<175x512xf32, #tpu.memory_space<vmem>>, vector<175x512xf32>
    %cst = arith.constant dense<0.000000e+00> : vector<44x512xf32>
    %2 = tpu.matmul %0, %1, %cst {dimension_numbers = #tpu.dot_dimension_numbers<[1], [0], [0], [1], [0, 0, 1, 1], [], []>} : vector<44x175xf32>, vector<175x512xf32>, vector<44x512xf32> -> vector<44x512xf32>
    %c0_3 = arith.constant 0 : index
    %c0_4 = arith.constant 0 : index
    %3 = vector.load %arg4[%c0_3, %c0_4] : memref<224x64xf32, #tpu.memory_space<vmem>>, vector<16x44xf32>
    %4 = vector.extract_strided_slice %2 {offsets = [0, 0], sizes = [44, 128], strides = [1, 1]} : vector<44x512xf32> to vector<44x128xf32>
    %cst_5 = arith.constant dense<0.000000e+00> : vector<16x128xf32>
    %5 = tpu.matmul %3, %4, %cst_5 {dimension_numbers = #tpu.dot_dimension_numbers<[1], [0], [0], [1], [0, 0, 1, 1], [], []>} : vector<16x44xf32>, vector<44x128xf32>, vector<16x128xf32> -> vector<16x128xf32>
    %c16 = arith.constant 16 : index
    %c0_6 = arith.constant 0 : index
    %6 = vector.load %arg4[%c16, %c0_6] : memref<224x64xf32, #tpu.memory_space<vmem>>, vector<16x44xf32>
    %7 = vector.extract_strided_slice %2 {offsets = [0, 128], sizes = [44, 128], strides = [1, 1]} : vector<44x512xf32> to vector<44x128xf32>
    %cst_7 = arith.constant dense<0.000000e+00> : vector<16x128xf32>
    %8 = tpu.matmul %6, %7, %cst_7 {dimension_numbers = #tpu.dot_dimension_numbers<[1], [0], [0], [1], [0, 0, 1, 1], [], []>} : vector<16x44xf32>, vector<44x128xf32>, vector<16x128xf32> -> vector<16x128xf32>
    %9 = arith.addf %5, %8 : vector<16x128xf32>
    %c32 = arith.constant 32 : index
    %c0_8 = arith.constant 0 : index
    %10 = vector.load %arg4[%c32, %c0_8] : memref<224x64xf32, #tpu.memory_space<vmem>>, vector<16x44xf32>
    %11 = vector.extract_strided_slice %2 {offsets = [0, 256], sizes = [44, 128], strides = [1, 1]} : vector<44x512xf32> to vector<44x128xf32>
    %cst_9 = arith.constant dense<0.000000e+00> : vector<16x128xf32>
    %12 = tpu.matmul %10, %11, %cst_9 {dimension_numbers = #tpu.dot_dimension_numbers<[1], [0], [0], [1], [0, 0, 1, 1], [], []>} : vector<16x44xf32>, vector<44x128xf32>, vector<16x128xf32> -> vector<16x128xf32>
    %13 = arith.addf %9, %12 : vector<16x128xf32>
    %c48 = arith.constant 48 : index
    %c0_10 = arith.constant 0 : index
    %14 = vector.load %arg4[%c48, %c0_10] : memref<224x64xf32, #tpu.memory_space<vmem>>, vector<16x44xf32>
    %15 = vector.extract_strided_slice %2 {offsets = [0, 384], sizes = [44, 128], strides = [1, 1]} : vector<44x512xf32> to vector<44x128xf32>
    %cst_11 = arith.constant dense<0.000000e+00> : vector<16x128xf32>
    %16 = tpu.matmul %14, %15, %cst_11 {dimension_numbers = #tpu.dot_dimension_numbers<[1], [0], [0], [1], [0, 0, 1, 1], [], []>} : vector<16x44xf32>, vector<44x128xf32>, vector<16x128xf32> -> vector<16x128xf32>
    %17 = arith.addf %13, %16 : vector<16x128xf32>
    %c208 = arith.constant 208 : index
    %c0_12 = arith.constant 0 : index
    %18 = vector.load %arg4[%c208, %c0_12] : memref<224x64xf32, #tpu.memory_space<vmem>>, vector<16x1xf32>
    %19 = vector.broadcast %18 : vector<16x1xf32> to vector<16x128xf32>
    %20 = arith.addf %17, %19 : vector<16x128xf32>
    %cst_13 = arith.constant 0.000000e+00 : f32
    %21 = vector.broadcast %cst_13 : f32 to vector<16x128xf32>
    %22 = arith.cmpf ogt, %20, %21 : vector<16x128xf32>
    %cst_14 = arith.constant 0.000000e+00 : f32
    %23 = vector.broadcast %cst_14 : f32 to vector<16x128xf32>
    %24 = arith.minimumf %20, %23 : vector<16x128xf32>
    %25 = math.exp %24 : vector<16x128xf32>
    %cst_15 = arith.constant 1.000000e+00 : f32
    %26 = vector.broadcast %cst_15 : f32 to vector<16x128xf32>
    %27 = arith.subf %25, %26 : vector<16x128xf32>
    %28 = arith.select %22, %20, %27 : vector<16x128xi1>, vector<16x128xf32>
    %c64 = arith.constant 64 : index
    %c0_16 = arith.constant 0 : index
    %29 = vector.load %arg4[%c64, %c0_16] : memref<224x64xf32, #tpu.memory_space<vmem>>, vector<128x29xf32>
    %cst_17 = arith.constant dense<0.000000e+00> : vector<16x29xf32>
    %30 = tpu.matmul %28, %29, %cst_17 {dimension_numbers = #tpu.dot_dimension_numbers<[1], [0], [0], [1], [0, 0, 1, 1], [], []>} : vector<16x128xf32>, vector<128x29xf32>, vector<16x29xf32> -> vector<16x29xf32>
    %31 = vector.extract_strided_slice %30 {offsets = [0, 0], sizes = [16, 14], strides = [1, 1]} : vector<16x29xf32> to vector<16x14xf32>
    %32 = vector.extract_strided_slice %30 {offsets = [0, 1], sizes = [16, 14], strides = [1, 1]} : vector<16x29xf32> to vector<16x14xf32>
    %33 = vector.extract_strided_slice %30 {offsets = [0, 2], sizes = [16, 14], strides = [1, 1]} : vector<16x29xf32> to vector<16x14xf32>
    %34 = vector.extract_strided_slice %30 {offsets = [0, 3], sizes = [16, 14], strides = [1, 1]} : vector<16x29xf32> to vector<16x14xf32>
    %35 = vector.extract_strided_slice %30 {offsets = [0, 4], sizes = [16, 14], strides = [1, 1]} : vector<16x29xf32> to vector<16x14xf32>
    %36 = vector.extract_strided_slice %30 {offsets = [0, 5], sizes = [16, 14], strides = [1, 1]} : vector<16x29xf32> to vector<16x14xf32>
    %37 = vector.extract_strided_slice %30 {offsets = [0, 6], sizes = [16, 14], strides = [1, 1]} : vector<16x29xf32> to vector<16x14xf32>
    %38 = vector.extract_strided_slice %30 {offsets = [0, 7], sizes = [16, 14], strides = [1, 1]} : vector<16x29xf32> to vector<16x14xf32>
    %39 = vector.extract_strided_slice %30 {offsets = [0, 8], sizes = [16, 14], strides = [1, 1]} : vector<16x29xf32> to vector<16x14xf32>
    %40 = vector.extract_strided_slice %30 {offsets = [0, 9], sizes = [16, 14], strides = [1, 1]} : vector<16x29xf32> to vector<16x14xf32>
    %41 = vector.extract_strided_slice %30 {offsets = [0, 10], sizes = [16, 14], strides = [1, 1]} : vector<16x29xf32> to vector<16x14xf32>
    %42 = vector.extract_strided_slice %30 {offsets = [0, 11], sizes = [16, 14], strides = [1, 1]} : vector<16x29xf32> to vector<16x14xf32>
    %43 = vector.extract_strided_slice %30 {offsets = [0, 12], sizes = [16, 14], strides = [1, 1]} : vector<16x29xf32> to vector<16x14xf32>
    %44 = vector.extract_strided_slice %30 {offsets = [0, 13], sizes = [16, 14], strides = [1, 1]} : vector<16x29xf32> to vector<16x14xf32>
    %45 = vector.extract_strided_slice %30 {offsets = [0, 14], sizes = [16, 14], strides = [1, 1]} : vector<16x29xf32> to vector<16x14xf32>
    %46 = vector.extract_strided_slice %30 {offsets = [0, 15], sizes = [16, 14], strides = [1, 1]} : vector<16x29xf32> to vector<16x14xf32>
    %47 = tpu.concatenate %31, %32, %33, %34, %35, %36, %37, %38, %39, %40, %41, %42, %43, %44, %45, %46 in 0 : vector<16x14xf32>, vector<16x14xf32>, vector<16x14xf32>, vector<16x14xf32>, vector<16x14xf32>, vector<16x14xf32>, vector<16x14xf32>, vector<16x14xf32>, vector<16x14xf32>, vector<16x14xf32>, vector<16x14xf32>, vector<16x14xf32>, vector<16x14xf32>, vector<16x14xf32>, vector<16x14xf32>, vector<16x14xf32> -> vector<256x14xf32>
    %c0_18 = arith.constant 0 : index
    %c0_19 = arith.constant 0 : index
    %48 = vector.load %arg3[%c0_18, %c0_19] : memref<16x256xf32, #tpu.memory_space<vmem>>, vector<16x256xf32>
    %cst_20 = arith.constant dense<0.000000e+00> : vector<16x14xf32>
    %49 = tpu.matmul %48, %47, %cst_20 {dimension_numbers = #tpu.dot_dimension_numbers<[1], [0], [0], [1], [0, 0, 1, 1], [], []>} : vector<16x256xf32>, vector<256x14xf32>, vector<16x14xf32> -> vector<16x14xf32>
    %c208_21 = arith.constant 208 : index
    %c1 = arith.constant 1 : index
    %50 = vector.load %arg4[%c208_21, %c1] : memref<224x64xf32, #tpu.memory_space<vmem>>, vector<16x1xf32>
    %51 = vector.broadcast %50 : vector<16x1xf32> to vector<16x14xf32>
    %52 = arith.addf %49, %51 : vector<16x14xf32>
    %cst_22 = arith.constant 0.000000e+00 : f32
    %53 = vector.broadcast %cst_22 : f32 to vector<16x14xf32>
    %54 = arith.cmpf ogt, %52, %53 : vector<16x14xf32>
    %cst_23 = arith.constant 0.000000e+00 : f32
    %55 = vector.broadcast %cst_23 : f32 to vector<16x14xf32>
    %56 = arith.minimumf %52, %55 : vector<16x14xf32>
    %57 = math.exp %56 : vector<16x14xf32>
    %cst_24 = arith.constant 1.000000e+00 : f32
    %58 = vector.broadcast %cst_24 : f32 to vector<16x14xf32>
    %59 = arith.subf %57, %58 : vector<16x14xf32>
    %60 = arith.select %54, %52, %59 : vector<16x14xi1>, vector<16x14xf32>
    %c192 = arith.constant 192 : index
    %c0_25 = arith.constant 0 : index
    %61 = vector.load %arg4[%c192, %c0_25] : memref<224x64xf32, #tpu.memory_space<vmem>>, vector<14x2xf32>
    %cst_26 = arith.constant dense<0.000000e+00> : vector<16x2xf32>
    %62 = tpu.matmul %60, %61, %cst_26 {dimension_numbers = #tpu.dot_dimension_numbers<[1], [0], [0], [1], [0, 0, 1, 1], [], []>} : vector<16x14xf32>, vector<14x2xf32>, vector<16x2xf32> -> vector<16x2xf32>
    %c0_27 = arith.constant 0 : index
    %c0_28 = arith.constant 0 : index
    %63 = vector.load %arg5[%c0_27, %c0_28] : memref<16x2xf32, #tpu.memory_space<vmem>>, vector<16x2xf32>
    tpu.vector_store %arg5[%c0_27, %c0_28], %62 {strides = array<i32>} : memref<16x2xf32, #tpu.memory_space<vmem>>, vector<16x2xf32>,
    return
  }
  func.func @transform_0(%arg0: i32) -> (i32, i32) {
    %c0_i32 = arith.constant 0 : i32
    %c0_i32_0 = arith.constant 0 : i32
    %c0_i32_1 = arith.constant 0 : i32
    return %c0_i32, %c0_i32_0 : i32, i32
  }
  func.func @transform_1(%arg0: i32) -> (i32, i32) {
    %c0_i32 = arith.constant 0 : i32
    %c0_i32_0 = arith.constant 0 : i32
    %c0_i32_1 = arith.constant 0 : i32
    return %c0_i32, %c0_i32_0 : i32, i32
  }
  func.func @transform_2(%arg0: i32) -> (i32, i32) {
    %c0_i32 = arith.constant 0 : i32
    %c0_i32_0 = arith.constant 0 : i32
    %c0_i32_1 = arith.constant 0 : i32
    return %c0_i32, %c0_i32_0 : i32, i32
  }
  func.func @transform_3(%arg0: i32) -> (i32, i32) {
    %c0_i32 = arith.constant 0 : i32
    %c0_i32_0 = arith.constant 0 : i32
    %c0_i32_1 = arith.constant 0 : i32
    return %c0_i32, %c0_i32_0 : i32, i32
  }
  func.func @transform_4(%arg0: i32) -> (i32, i32) {
    %c0_i32 = arith.constant 0 : i32
    %c0_i32_0 = arith.constant 0 : i32
    %c0_i32_1 = arith.constant 0 : i32
    return %c0_i32, %c0_i32_0 : i32, i32
  }
}

</mosaic_0001>

<llo_original>
// kernel: conv_module_forward.1
$region0: #{conv_module_forward.1}
  #allocation0 [shape = 'u32[]', space=smem, size = 0x4, offset = 0x4, fixed_abs, tag = 'smem constant byte address 0x4 - core index']
  #allocation1 [shape = 'u32[144,128]{1,0:T(1,128)}', space=vmem, size = 0x12000, scoped, tag = 'internal scratch']
  %s0 = inlined_call_operand.vmem [shape: f32[44,175], index: 0, kind: input, shape index: {}]
  %s1 = inlined_call_operand.vmem [shape: f32[175,512], index: 1, kind: input, shape index: {}]
  %s2 = inlined_call_operand.vmem [shape: f32[16,256], index: 2, kind: input, shape index: {}]
  %s3 = inlined_call_operand.vmem [shape: f32[224,64], index: 3, kind: input, shape index: {}]
  %s4 = inlined_call_operand.vmem [shape: f32[16,2], index: 4, kind: output, shape index: {}]
  %s5 = sld [smem:[#allocation0]]
  $region26: #{conv_module_forward.1} parent=0
    _
  %s7 = ssub.s32 1, %s5
  %s8 = scalar_select 0, %s7, %s5
  // Predicated region
  $region2: #{conv_module_forward.1} parent=0 // pred_check
    _
  $region3: #{conv_module_forward.1} parent=0 // pred_check_branch
    %10 = sbr.rel (0) target = $region5
  $region4: #{conv_module_forward.1} parent=0 // pred_region
    _
  $region5: #{conv_module_forward.1} parent=0 // pred_fallthru
    _
  // Predicated region
  $region6: #{conv_module_forward.1} parent=0 // pred_check
    _
  $region7: #{conv_module_forward.1} parent=0 // pred_check_branch
    %12 = sbr.rel (0) target = $region9
  $region8: #{conv_module_forward.1} parent=0 // pred_region
    _
  $region9: #{conv_module_forward.1} parent=0 // pred_fallthru
    _
  // Predicated region
  $region10: #{conv_module_forward.1} parent=0 // pred_check
    _
  $region11: #{conv_module_forward.1} parent=0 // pred_check_branch
    %14 = sbr.rel (0) target = $region13
  $region12: #{conv_module_forward.1} parent=0 // pred_region
    _
  $region13: #{conv_module_forward.1} parent=0 // pred_fallthru
    _
  // Predicated region
  $region14: #{conv_module_forward.1} parent=0 // pred_check
    _
  $region15: #{conv_module_forward.1} parent=0 // pred_check_branch
    %16 = sbr.rel (0) target = $region17
  $region16: #{conv_module_forward.1} parent=0 // pred_region
    _
  $region17: #{conv_module_forward.1} parent=0 // pred_fallthru
    _
  %v17 = vld [vmem:[%s0] sm:$0xff]
  %v18 = vld [vmem:[%s0 + $0x8] sm:$0xff]
  %v19 = vld [vmem:[%s0 + $0x10] sm:$0xff]
  %v20 = vld [vmem:[%s0 + $0x18] sm:$0xff]
  %v21 = vld [vmem:[%s0 + $0x20] sm:$0xff]
  %v22 = vld [vmem:[%s0 + $0x28] sm:$0xff]
  %v23 = vld [vmem:[%s0 + $0x30] sm:$0xff]
  %v24 = vld [vmem:[%s0 + $0x38] sm:$0xff]
  %v25 = vld [vmem:[%s0 + $0x40] sm:$0xff]
  %v26 = vld [vmem:[%s0 + $0x48] sm:$0xff]
  %v27 = vld [vmem:[%s0 + $0x50] sm:$0xf]
  %v28 = vld [vmem:[%s0 + $0x58] sm:$0xf]
  %v29 = vld [vmem:[%s1] sm:$0xff]
  %v30 = vld [vmem:[%s1 + $0x8] sm:$0xff]
  %v31 = vld [vmem:[%s1 + $0x10] sm:$0xff]
  %v32 = vld [vmem:[%s1 + $0x18] sm:$0xff]
  %v33 = vld [vmem:[%s1 + $0x20] sm:$0xff]
  %v34 = vld [vmem:[%s1 + $0x28] sm:$0xff]
  %v35 = vld [vmem:[%s1 + $0x30] sm:$0xff]
  %v36 = vld [vmem:[%s1 + $0x38] sm:$0xff]
  %v37 = vld [vmem:[%s1 + $0x40] sm:$0xff]
  %v38 = vld [vmem:[%s1 + $0x48] sm:$0xff]
  %v39 = vld [vmem:[%s1 + $0x50] sm:$0xff]
  %v40 = vld [vmem:[%s1 + $0x58] sm:$0xff]
  %v41 = vld [vmem:[%s1 + $0x60] sm:$0xff]
  %v42 = vld [vmem:[%s1 + $0x68] sm:$0xff]
  %v43 = vld [vmem:[%s1 + $0x70] sm:$0xff]
  %v44 = vld [vmem:[%s1 + $0x78] sm:$0xff]
  %v45 = vld [vmem:[%s1 + $0x80] sm:$0xff]
  %v46 = vld [vmem:[%s1 + $0x88] sm:$0xff]
  %v47 = vld [vmem:[%s1 + $0x90] sm:$0xff]
  %v48 = vld [vmem:[%s1 + $0x98] sm:$0xff]
  %v49 = vld [vmem:[%s1 + $0xa0] sm:$0xff]
  %v50 = vld [vmem:[%s1 + $0xa8] sm:$0xff]
  %v51 = vld [vmem:[%s1 + $0xb0] sm:$0xff]
  %v52 = vld [vmem:[%s1 + $0xb8] sm:$0xff]
  %v53 = vld [vmem:[%s1 + $0xc0] sm:$0xff]
  %v54 = vld [vmem:[%s1 + $0xc8] sm:$0xff]
  %v55 = vld [vmem:[%s1 + $0xd0] sm:$0xff]
  %v56 = vld [vmem:[%s1 + $0xd8] sm:$0xff]
  %v57 = vld [vmem:[%s1 + $0xe0] sm:$0xff]
  %v58 = vld [vmem:[%s1 + $0xe8] sm:$0xff]
  %v59 = vld [vmem:[%s1 + $0xf0] sm:$0xff]
  %v60 = vld [vmem:[%s1 + $0xf8] sm:$0xff]
  %v61 = vld [vmem:[%s1 + $0x100] sm:$0xff]
  %v62 = vld [vmem:[%s1 + $0x108] sm:$0xff]
  %v63 = vld [vmem:[%s1 + $0x110] sm:$0xff]
  %v64 = vld [vmem:[%s1 + $0x118] sm:$0xff]
  %v65 = vld [vmem:[%s1 + $0x120] sm:$0xff]
  %v66 = vld [vmem:[%s1 + $0x128] sm:$0xff]
  %v67 = vld [vmem:[%s1 + $0x130] sm:$0xff]
  %v68 = vld [vmem:[%s1 + $0x138] sm:$0xff]
  %v69 = vld [vmem:[%s1 + $0x140] sm:$0xff]
  %v70 = vld [vmem:[%s1 + $0x148] sm:$0xff]
  %v71 = vld [vmem:[%s1 + $0x150] sm:$0xff]
  %v72 = vld [vmem:[%s1 + $0x158] sm:$0xff]
  %v73 = vld [vmem:[%s1 + $0x160] sm:$0xff]
  %v74 = vld [vmem:[%s1 + $0x168] sm:$0xff]
  %v75 = vld [vmem:[%s1 + $0x170] sm:$0xff]
  %v76 = vld [vmem:[%s1 + $0x178] sm:$0xff]
  %v77 = vld [vmem:[%s1 + $0x180] sm:$0xff]
  %v78 = vld [vmem:[%s1 + $0x188] sm:$0xff]
  %v79 = vld [vmem:[%s1 + $0x190] sm:$0xff]
  %v80 = vld [vmem:[%s1 + $0x198] sm:$0xff]
  %v81 = vld [vmem:[%s1 + $0x1a0] sm:$0xff]
  %v82 = vld [vmem:[%s1 + $0x1a8] sm:$0xff]
  %v83 = vld [vmem:[%s1 + $0x1b0] sm:$0xff]
  %v84 = vld [vmem:[%s1 + $0x1b8] sm:$0xff]
  %v85 = vld [vmem:[%s1 + $0x1c0] sm:$0xff]
  %v86 = vld [vmem:[%s1 + $0x1c8] sm:$0xff]
  %v87 = vld [vmem:[%s1 + $0x1d0] sm:$0xff]
  %v88 = vld [vmem:[%s1 + $0x1d8] sm:$0xff]
  %v89 = vld [vmem:[%s1 + $0x1e0] sm:$0xff]
  %v90 = vld [vmem:[%s1 + $0x1e8] sm:$0xff]
  %v91 = vld [vmem:[%s1 + $0x1f0] sm:$0xff]
  %v92 = vld [vmem:[%s1 + $0x1f8] sm:$0xff]
  %v93 = vld [vmem:[%s1 + $0x200] sm:$0xff]
  %v94 = vld [vmem:[%s1 + $0x208] sm:$0xff]
  %v95 = vld [vmem:[%s1 + $0x210] sm:$0xff]
  %v96 = vld [vmem:[%s1 + $0x218] sm:$0xff]
  %v97 = vld [vmem:[%s1 + $0x220] sm:$0xff]
  %v98 = vld [vmem:[%s1 + $0x228] sm:$0xff]
  %v99 = vld [vmem:[%s1 + $0x230] sm:$0xff]
  %v100 = vld [vmem:[%s1 + $0x238] sm:$0xff]
  %v101 = vld [vmem:[%s1 + $0x240] sm:$0xff]
  %v102 = vld [vmem:[%s1 + $0x248] sm:$0xff]
  %v103 = vld [vmem:[%s1 + $0x250] sm:$0xff]
  %v104 = vld [vmem:[%s1 + $0x258] sm:$0xff]
  %v105 = vld [vmem:[%s1 + $0x260] sm:$0xff]
  %v106 = vld [vmem:[%s1 + $0x268] sm:$0xff]
  %v107 = vld [vmem:[%s1 + $0x270] sm:$0xff]
  %v108 = vld [vmem:[%s1 + $0x278] sm:$0xff]
  %v109 = vld [vmem:[%s1 + $0x280] sm:$0xff]
  %v110 = vld [vmem:[%s1 + $0x288] sm:$0xff]
  %v111 = vld [vmem:[%s1 + $0x290] sm:$0xff]
  %v112 = vld [vmem:[%s1 + $0x298] sm:$0xff]
  %v113 = vld [vmem:[%s1 + $0x2a0] sm:$0x7f]
  %v114 = vld [vmem:[%s1 + $0x2a8] sm:$0x7f]
  %v115 = vld [vmem:[%s1 + $0x2b0] sm:$0x7f]
  %v116 = vld [vmem:[%s1 + $0x2b8] sm:$0x7f]
  %vm117 = vcmask 384000
  %v119 = vsel %vm117, %v18, 0
  %v122 = vsel %vm117, %v20, 0
  %v125 = vsel %vm117, %v22, 0
  %v128 = vsel %vm117, %v24, 0
  %v131 = vsel %vm117, %v26, 0
  %v134 = vsel %vm117, %v28, 0
  %vm136 = vcmask 1046528
  %v138 = vsel %vm136, %v113, 0
  %v141 = vsel %vm136, %v114, 0
  %v144 = vsel %vm136, %v115, 0
  %v147 = vsel %vm136, %v116, 0
  %149 = vmatprep.subr.mxu0 %v30
  %150 = vmatpush1.msra.mxu0 %v29
  %151 = vmatprep.subr.mxu0 %v34
  %152 = vmatpush1.msra.mxu0 %v33
  %153 = vmatprep.subr.mxu0 %v38
  %154 = vmatpush1.msra.mxu0 %v37
  %155 = vmatprep.subr.mxu0 %v42
  %156 = vmatpush1.msra.mxu0 %v41
  %157 = vmatprep.subr.mxu0 %v46
  %158 = vmatpush1.msra.mxu0 %v45
  %159 = vmatprep.subr.mxu0 %v50
  %160 = vmatpush1.msra.mxu0 %v49
  %161 = vmatprep.subr.mxu0 %v54
  %162 = vmatpush1.msra.mxu0 %v53
  %163 = vmatprep.subr.mxu0 %v58
  %164 = vmatpush1.msra.mxu0 %v57
  %165 = vmatprep.subr.mxu0 %v62
  %166 = vmatpush1.msra.mxu0 %v61
  %167 = vmatprep.subr.mxu0 %v66
  %168 = vmatpush1.msra.mxu0 %v65
  %169 = vmatprep.subr.mxu0 %v70
  %170 = vmatpush1.msra.mxu0 %v69
  %171 = vmatprep.subr.mxu0 %v74
  %172 = vmatpush1.msra.mxu0 %v73
  %173 = vmatprep.subr.mxu0 %v78
  %174 = vmatpush1.msra.mxu0 %v77
  %175 = vmatprep.subr.mxu0 %v82
  %176 = vmatpush1.msra.mxu0 %v81
  %177 = vmatprep.subr.mxu0 %v86
  %178 = vmatpush1.msra.mxu0 %v85
  %179 = vmatprep.subr.mxu0 %v90
  %180 = vmatpush1.msra.mxu0 %v89
  %181 = vmatprep.subr.mxu0 %v94
  %182 = vmatpush1.msra.mxu0 %v93
  %183 = vmatprep.subr.mxu0 %v98
  %184 = vmatpush1.msra.mxu0 %v97
  %185 = vmatprep.subr.mxu0 %v102
  %186 = vmatpush1.msra.mxu0 %v101
  %187 = vmatprep.subr.mxu0 %v106
  %188 = vmatpush1.msra.mxu0 %v105
  %189 = vmatprep.subr.mxu0 %v110
  %190 = vmatpush1.msra.mxu0 %v109
  %191 = vmatprep.subr.mxu0 %v141
  %192 = vmatpush1.msra.mxu0 %v138
  %193 = vmatprep.subr.mxu0 0.0
  %194 = vmatpush1.msra.mxu0 0.0
  %195 = vmatprep.subr.mxu0 0.0
  %196 = vmatpush1.msra.mxu0 0.0
  %197 = vmatprep.subr.mxu0 0.0
  %198 = vmatpush1.msra.mxu0 0.0
  %199 = vmatprep.subr.mxu0 0.0
  %200 = vmatpush1.msra.mxu0 0.0
  %201 = vmatprep.subr.mxu0 0.0
  %202 = vmatpush1.msra.mxu0 0.0
  %203 = vmatprep.subr.mxu0 0.0
  %204 = vmatpush1.msra.mxu0 0.0
  %205 = vmatprep.subr.mxu0 0.0
  %206 = vmatpush1.msra.mxu0 0.0
  %207 = vmatprep.subr.mxu0 0.0
  %208 = vmatpush1.msra.mxu0 0.0
  %209 = vmatprep.subr.mxu0 0.0
  %210 = vmatpush1.msra.mxu0 0.0
  %211 = vmatprep.subr.mxu0 0.0
  %212 = vmatpush1.msra.mxu0 0.0
  %213 = vmatprep.mubr.f32.mxu0 %v119
  %214 = vmatmul.mubr.f32.gmra.mrb[0].mxu0 %v17
  %v215 = vpop.f32.mrb[0].mxu0
  %v216 = vadd.f32 0.0, %v215
  %v217 = vpop.f32.mrb[0].mxu0
  %v218 = vadd.f32 0.0, %v217
  %219 = vmatprep.mubr.f32.mxu0 %v122
  %220 = vmatmul.mubr.f32.gmra.mrb[0].mxu0 %v19
  %v221 = vpop.f32.mrb[0].mxu0
  %v222 = vadd.f32 0.0, %v221
  %v223 = vpop.f32.mrb[0].mxu0
  %v224 = vadd.f32 0.0, %v223
  %225 = vmatprep.mubr.f32.mxu0 %v125
  %226 = vmatmul.mubr.f32.gmra.mrb[0].mxu0 %v21
  %v227 = vpop.f32.mrb[0].mxu0
  %v228 = vadd.f32 0.0, %v227
  %v229 = vpop.f32.mrb[0].mxu0
  %v230 = vadd.f32 0.0, %v229
  %231 = vmatprep.mubr.f32.mxu0 %v128
  %232 = vmatmul.mubr.f32.gmra.mrb[0].mxu0 %v23
  %v233 = vpop.f32.mrb[0].mxu0
  %v234 = vadd.f32 0.0, %v233
  %v235 = vpop.f32.mrb[0].mxu0
  %v236 = vadd.f32 0.0, %v235
  %237 = vmatprep.mubr.f32.mxu0 %v131
  %238 = vmatmul.mubr.f32.gmra.mrb[0].mxu0 %v25
  %v239 = vpop.f32.mrb[0].mxu0
  %v240 = vadd.f32 0.0, %v239
  %v241 = vpop.f32.mrb[0].mxu0
  %v242 = vadd.f32 0.0, %v241
  %243 = vmatprep.mubr.f32.mxu0 %v134
  %244 = vmatmul.mubr.f32.gmra.mrb[0].mxu0 %v27
  %v245 = vpop.f32.mrb[0].mxu0
  %v246 = vadd.f32 0.0, %v245
  %v247 = vpop.f32.mrb[0].mxu0
  %v248 = vadd.f32 0.0, %v247
  %249 = vdwg.mxu0
  %250 = vmatprep.subr.mxu0 %v32
  %251 = vmatpush1.msra.mxu0 %v31
  %252 = vmatprep.subr.mxu0 %v36
  %253 = vmatpush1.msra.mxu0 %v35
  %254 = vmatprep.subr.mxu0 %v40
  %255 = vmatpush1.msra.mxu0 %v39
  %256 = vmatprep.subr.mxu0 %v44
  %257 = vmatpush1.msra.mxu0 %v43
  %258 = vmatprep.subr.mxu0 %v48
  %259 = vmatpush1.msra.mxu0 %v47
  %260 = vmatprep.subr.mxu0 %v52
  %261 = vmatpush1.msra.mxu0 %v51
  %262 = vmatprep.subr.mxu0 %v56
  %263 = vmatpush1.msra.mxu0 %v55
  %264 = vmatprep.subr.mxu0 %v60
  %265 = vmatpush1.msra.mxu0 %v59
  %266 = vmatprep.subr.mxu0 %v64
  %267 = vmatpush1.msra.mxu0 %v63
  %268 = vmatprep.subr.mxu0 %v68
  %269 = vmatpush1.msra.mxu0 %v67
  %270 = vmatprep.subr.mxu0 %v72
  %271 = vmatpush1.msra.mxu0 %v71
  %272 = vmatprep.subr.mxu0 %v76
  %273 = vmatpush1.msra.mxu0 %v75
  %274 = vmatprep.subr.mxu0 %v80
  %275 = vmatpush1.msra.mxu0 %v79
  %276 = vmatprep.subr.mxu0 %v84
  %277 = vmatpush1.msra.mxu0 %v83
  %278 = vmatprep.subr.mxu0 %v88
  %279 = vmatpush1.msra.mxu0 %v87
  %280 = vmatprep.subr.mxu0 %v92
  %281 = vmatpush1.msra.mxu0 %v91
  %282 = vmatprep.subr.mxu0 %v96
  %283 = vmatpush1.msra.mxu0 %v95
  %284 = vmatprep.subr.mxu0 %v100
  %285 = vmatpush1.msra.mxu0 %v99
  %286 = vmatprep.subr.mxu0 %v104
  %287 = vmatpush1.msra.mxu0 %v103
  %288 = vmatprep.subr.mxu0 %v108
  %289 = vmatpush1.msra.mxu0 %v107
  %290 = vmatprep.subr.mxu0 %v112
  %291 = vmatpush1.msra.mxu0 %v111
  %292 = vmatprep.subr.mxu0 %v147
  %293 = vmatpush1.msra.mxu0 %v144
  %294 = vmatprep.subr.mxu0 0.0
  %295 = vmatpush1.msra.mxu0 0.0
  %296 = vmatprep.subr.mxu0 0.0
  %297 = vmatpush1.msra.mxu0 0.0
  %298 = vmatprep.subr.mxu0 0.0
  %299 = vmatpush1.msra.mxu0 0.0
  %300 = vmatprep.subr.mxu0 0.0
  %301 = vmatpush1.msra.mxu0 0.0
  %302 = vmatprep.subr.mxu0 0.0
  %303 = vmatpush1.msra.mxu0 0.0
  %304 = vmatprep.subr.mxu0 0.0
  %305 = vmatpush1.msra.mxu0 0.0
  %306 = vmatprep.subr.mxu0 0.0
  %307 = vmatpush1.msra.mxu0 0.0
  %308 = vmatprep.subr.mxu0 0.0
  %309 = vmatpush1.msra.mxu0 0.0
  %310 = vmatprep.subr.mxu0 0.0
  %311 = vmatpush1.msra.mxu0 0.0
  %312 = vmatprep.subr.mxu0 0.0
  %313 = vmatpush1.msra.mxu0 0.0
  %314 = vmatprep.mubr.f32.mxu0 %v119
  %315 = vmatmul.mubr.f32.gmra.mrb[0].mxu0 %v17
  %v316 = vpop.f32.mrb[0].mxu0
  %v317 = vadd.f32 0.0, %v316
  %v318 = vpop.f32.mrb[0].mxu0
  %v319 = vadd.f32 0.0, %v318
  %320 = vmatprep.mubr.f32.mxu0 %v122
  %321 = vmatmul.mubr.f32.gmra.mrb[0].mxu0 %v19
  %v322 = vpop.f32.mrb[0].mxu0
  %v323 = vadd.f32 0.0, %v322
  %v324 = vpop.f32.mrb[0].mxu0
  %v325 = vadd.f32 0.0, %v324
  %326 = vmatprep.mubr.f32.mxu0 %v125
  %327 = vmatmul.mubr.f32.gmra.mrb[0].mxu0 %v21
  %v328 = vpop.f32.mrb[0].mxu0
  %v329 = vadd.f32 0.0, %v328
  %v330 = vpop.f32.mrb[0].mxu0
  %v331 = vadd.f32 0.0, %v330
  %332 = vmatprep.mubr.f32.mxu0 %v128
  %333 = vmatmul.mubr.f32.gmra.mrb[0].mxu0 %v23
  %v334 = vpop.f32.mrb[0].mxu0
  %v335 = vadd.f32 0.0, %v334
  %v336 = vpop.f32.mrb[0].mxu0
  %v337 = vadd.f32 0.0, %v336
  %338 = vmatprep.mubr.f32.mxu0 %v131
  %339 = vmatmul.mubr.f32.gmra.mrb[0].mxu0 %v25
  %v340 = vpop.f32.mrb[0].mxu0
  %v341 = vadd.f32 0.0, %v340
  %v342 = vpop.f32.mrb[0].mxu0
  %v343 = vadd.f32 0.0, %v342
  %344 = vmatprep.mubr.f32.mxu0 %v134
  %345 = vmatmul.mubr.f32.gmra.mrb[0].mxu0 %v27
  %v346 = vpop.f32.mrb[0].mxu0
  %v347 = vadd.f32 0.0, %v346
  %v348 = vpop.f32.mrb[0].mxu0
  %v349 = vadd.f32 0.0, %v348
  %350 = vdwg.mxu0
  %v351 = vld [vmem:[%s3] sm:$0xff]
  %v352 = vld [vmem:[%s3 + $0x8] sm:$0xff]
  %v353 = vld [vmem:[%s3 + $0x10] sm:$0xff]
  %v354 = vld [vmem:[%s3 + $0x18] sm:$0xff]
  %vm355 = vcmask 359424
  %v357 = vsel %vm355, %v353, 0
  %v360 = vsel %vm355, %v354, 0
  %vm362 = vcmask 1043456
  %v364 = vsel %vm362, %v248, 0
  %366 = vmatprep.subr.mxu0 0.0
  %367 = vmatpush1.msra.mxu0 %v218
  %368 = vmatprep.subr.mxu0 0.0
  %369 = vmatpush1.msra.mxu0 %v224
  %370 = vmatprep.subr.mxu0 0.0
  %371 = vmatpush1.msra.mxu0 %v230
  %372 = vmatprep.subr.mxu0 0.0
  %373 = vmatpush1.msra.mxu0 %v236
  %374 = vmatprep.subr.mxu0 0.0
  %375 = vmatpush1.msra.mxu0 %v242
  %376 = vmatprep.subr.mxu0 0.0
  %377 = vmatpush1.msra.mxu0 %v364
  %378 = vmatprep.subr.mxu0 0.0
  %379 = vmatpush1.msra.mxu0 0.0
  %380 = vmatprep.subr.mxu0 0.0
  %381 = vmatpush1.msra.mxu0 0.0
  %382 = vmatprep.subr.mxu0 0.0
  %383 = vmatpush1.msra.mxu0 0.0
  %384 = vmatprep.subr.mxu0 0.0
  %385 = vmatpush1.msra.mxu0 0.0
  %386 = vmatprep.subr.mxu0 0.0
  %387 = vmatpush1.msra.mxu0 0.0
  %388 = vmatprep.subr.mxu0 0.0
  %389 = vmatpush1.msra.mxu0 0.0
  %390 = vmatprep.subr.mxu0 0.0
  %391 = vmatpush1.msra.mxu0 0.0
  %392 = vmatprep.subr.mxu0 0.0
  %393 = vmatpush1.msra.mxu0 0.0
  %394 = vmatprep.subr.mxu0 0.0
  %395 = vmatpush1.msra.mxu0 0.0
  %396 = vmatprep.subr.mxu0 0.0
  %397 = vmatpush1.msra.mxu0 0.0
  %398 = vmatprep.subr.mxu0 0.0
  %399 = vmatpush1.msra.mxu0 0.0
  %400 = vmatprep.subr.mxu0 0.0
  %401 = vmatpush1.msra.mxu0 0.0
  %402 = vmatprep.subr.mxu0 0.0
  %403 = vmatpush1.msra.mxu0 0.0
  %404 = vmatprep.subr.mxu0 0.0
  %405 = vmatpush1.msra.mxu0 0.0
  %406 = vmatprep.subr.mxu0 0.0
  %407 = vmatpush1.msra.mxu0 0.0
  %408 = vmatprep.subr.mxu0 0.0
  %409 = vmatpush1.msra.mxu0 0.0
  %410 = vmatprep.subr.mxu0 0.0
  %411 = vmatpush1.msra.mxu0 0.0
  %412 = vmatprep.subr.mxu0 0.0
  %413 = vmatpush1.msra.mxu0 0.0
  %414 = vmatprep.subr.mxu0 0.0
  %415 = vmatpush1.msra.mxu0 0.0
  %416 = vmatprep.subr.mxu0 0.0
  %417 = vmatpush1.msra.mxu0 0.0
  %418 = vmatprep.subr.mxu0 0.0
  %419 = vmatpush1.msra.mxu0 0.0
  %420 = vmatprep.subr.mxu0 0.0
  %421 = vmatpush1.msra.mxu0 0.0
  %422 = vmatprep.subr.mxu0 0.0
  %423 = vmatpush1.msra.mxu0 0.0
  %424 = vmatprep.subr.mxu0 0.0
  %425 = vmatpush1.msra.mxu0 0.0
  %426 = vmatprep.subr.mxu0 0.0
  %427 = vmatpush1.msra.mxu0 0.0
  %428 = vmatprep.subr.mxu0 0.0
  %429 = vmatpush1.msra.mxu0 0.0
  %430 = vmatprep.mubr.f32.mxu0 0.0
  %431 = vmatmul.mubr.f32.gmra.mrb[0].mxu0 %v357
  %v432 = vpop.f32.mrb[0].mxu0
  %v433 = vadd.f32 0.0, %v432
  %v434 = vpop.f32.mrb[0].mxu0
  %435 = vmatprep.mubr.f32.mxu0 0.0
  %436 = vmatmul.mubr.f32.gmra.mrb[0].mxu0 %v360
  %v437 = vpop.f32.mrb[0].mxu0
  %v438 = vadd.f32 0.0, %v437
  %v439 = vpop.f32.mrb[0].mxu0
  %440 = vdwg.mxu0
  %v442 = vsel %vm355, %v351, 0
  %v445 = vsel %vm355, %v352, 0
  %v448 = vsel %vm362, %v246, 0
  %450 = vmatprep.subr.mxu0 0.0
  %451 = vmatpush1.msra.mxu0 %v216
  %452 = vmatprep.subr.mxu0 0.0
  %453 = vmatpush1.msra.mxu0 %v222
  %454 = vmatprep.subr.mxu0 0.0
  %455 = vmatpush1.msra.mxu0 %v228
  %456 = vmatprep.subr.mxu0 0.0
  %457 = vmatpush1.msra.mxu0 %v234
  %458 = vmatprep.subr.mxu0 0.0
  %459 = vmatpush1.msra.mxu0 %v240
  %460 = vmatprep.subr.mxu0 0.0
  %461 = vmatpush1.msra.mxu0 %v448
  %462 = vmatprep.subr.mxu0 0.0
  %463 = vmatpush1.msra.mxu0 0.0
  %464 = vmatprep.subr.mxu0 0.0
  %465 = vmatpush1.msra.mxu0 0.0
  %466 = vmatprep.subr.mxu0 0.0
  %467 = vmatpush1.msra.mxu0 0.0
  %468 = vmatprep.subr.mxu0 0.0
  %469 = vmatpush1.msra.mxu0 0.0
  %470 = vmatprep.subr.mxu0 0.0
  %471 = vmatpush1.msra.mxu0 0.0
  %472 = vmatprep.subr.mxu0 0.0
  %473 = vmatpush1.msra.mxu0 0.0
  %474 = vmatprep.subr.mxu0 0.0
  %475 = vmatpush1.msra.mxu0 0.0
  %476 = vmatprep.subr.mxu0 0.0
  %477 = vmatpush1.msra.mxu0 0.0
  %478 = vmatprep.subr.mxu0 0.0
  %479 = vmatpush1.msra.mxu0 0.0
  %480 = vmatprep.subr.mxu0 0.0
  %481 = vmatpush1.msra.mxu0 0.0
  %482 = vmatprep.subr.mxu0 0.0
  %483 = vmatpush1.msra.mxu0 0.0
  %484 = vmatprep.subr.mxu0 0.0
  %485 = vmatpush1.msra.mxu0 0.0
  %486 = vmatprep.subr.mxu0 0.0
  %487 = vmatpush1.msra.mxu0 0.0
  %488 = vmatprep.subr.mxu0 0.0
  %489 = vmatpush1.msra.mxu0 0.0
  %490 = vmatprep.subr.mxu0 0.0
  %491 = vmatpush1.msra.mxu0 0.0
  %492 = vmatprep.subr.mxu0 0.0
  %493 = vmatpush1.msra.mxu0 0.0
  %494 = vmatprep.subr.mxu0 0.0
  %495 = vmatpush1.msra.mxu0 0.0
  %496 = vmatprep.subr.mxu0 0.0
  %497 = vmatpush1.msra.mxu0 0.0
  %498 = vmatprep.subr.mxu0 0.0
  %499 = vmatpush1.msra.mxu0 0.0
  %500 = vmatprep.subr.mxu0 0.0
  %501 = vmatpush1.msra.mxu0 0.0
  %502 = vmatprep.subr.mxu0 0.0
  %503 = vmatpush1.msra.mxu0 0.0
  %504 = vmatprep.subr.mxu0 0.0
  %505 = vmatpush1.msra.mxu0 0.0
  %506 = vmatprep.subr.mxu0 0.0
  %507 = vmatpush1.msra.mxu0 0.0
  %508 = vmatprep.subr.mxu0 0.0
  %509 = vmatpush1.msra.mxu0 0.0
  %510 = vmatprep.subr.mxu0 0.0
  %511 = vmatpush1.msra.mxu0 0.0
  %512 = vmatprep.subr.mxu0 0.0
  %513 = vmatpush1.msra.mxu0 0.0
  %514 = vmatprep.mubr.f32.mxu0 0.0
  %515 = vmatmul.mubr.f32.gmra.mrb[0].mxu0 %v442
  %v516 = vpop.f32.mrb[0].mxu0
  %v517 = vadd.f32 %v433, %v516
  %v518 = vpop.f32.mrb[0].mxu0
  %519 = vmatprep.mubr.f32.mxu0 0.0
  %520 = vmatmul.mubr.f32.gmra.mrb[0].mxu0 %v445
  %v521 = vpop.f32.mrb[0].mxu0
  %v522 = vadd.f32 %v438, %v521
  %v523 = vpop.f32.mrb[0].mxu0
  %524 = vdwg.mxu0
  %v525 = vld [vmem:[%s3 + $0x20] sm:$0xff]
  %v526 = vld [vmem:[%s3 + $0x28] sm:$0xff]
  %v528 = vsel %vm355, %v525, 0
  %v531 = vsel %vm355, %v526, 0
  %v534 = vsel %vm362, %v347, 0
  %536 = vmatprep.subr.mxu0 0.0
  %537 = vmatpush1.msra.mxu0 %v317
  %538 = vmatprep.subr.mxu0 0.0
  %539 = vmatpush1.msra.mxu0 %v323
  %540 = vmatprep.subr.mxu0 0.0
  %541 = vmatpush1.msra.mxu0 %v329
  %542 = vmatprep.subr.mxu0 0.0
  %543 = vmatpush1.msra.mxu0 %v335
  %544 = vmatprep.subr.mxu0 0.0
  %545 = vmatpush1.msra.mxu0 %v341
  %546 = vmatprep.subr.mxu0 0.0
  %547 = vmatpush1.msra.mxu0 %v534
  %548 = vmatprep.subr.mxu0 0.0
  %549 = vmatpush1.msra.mxu0 0.0
  %550 = vmatprep.subr.mxu0 0.0
  %551 = vmatpush1.msra.mxu0 0.0
  %552 = vmatprep.subr.mxu0 0.0
  %553 = vmatpush1.msra.mxu0 0.0
  %554 = vmatprep.subr.mxu0 0.0
  %555 = vmatpush1.msra.mxu0 0.0
  %556 = vmatprep.subr.mxu0 0.0
  %557 = vmatpush1.msra.mxu0 0.0
  %558 = vmatprep.subr.mxu0 0.0
  %559 = vmatpush1.msra.mxu0 0.0
  %560 = vmatprep.subr.mxu0 0.0
  %561 = vmatpush1.msra.mxu0 0.0
  %562 = vmatprep.subr.mxu0 0.0
  %563 = vmatpush1.msra.mxu0 0.0
  %564 = vmatprep.subr.mxu0 0.0
  %565 = vmatpush1.msra.mxu0 0.0
  %566 = vmatprep.subr.mxu0 0.0
  %567 = vmatpush1.msra.mxu0 0.0
  %568 = vmatprep.subr.mxu0 0.0
  %569 = vmatpush1.msra.mxu0 0.0
  %570 = vmatprep.subr.mxu0 0.0
  %571 = vmatpush1.msra.mxu0 0.0
  %572 = vmatprep.subr.mxu0 0.0
  %573 = vmatpush1.msra.mxu0 0.0
  %574 = vmatprep.subr.mxu0 0.0
  %575 = vmatpush1.msra.mxu0 0.0
  %576 = vmatprep.subr.mxu0 0.0
  %577 = vmatpush1.msra.mxu0 0.0
  %578 = vmatprep.subr.mxu0 0.0
  %579 = vmatpush1.msra.mxu0 0.0
  %580 = vmatprep.subr.mxu0 0.0
  %581 = vmatpush1.msra.mxu0 0.0
  %582 = vmatprep.subr.mxu0 0.0
  %583 = vmatpush1.msra.mxu0 0.0
  %584 = vmatprep.subr.mxu0 0.0
  %585 = vmatpush1.msra.mxu0 0.0
  %586 = vmatprep.subr.mxu0 0.0
  %587 = vmatpush1.msra.mxu0 0.0
  %588 = vmatprep.subr.mxu0 0.0
  %589 = vmatpush1.msra.mxu0 0.0
  %590 = vmatprep.subr.mxu0 0.0
  %591 = vmatpush1.msra.mxu0 0.0
  %592 = vmatprep.subr.mxu0 0.0
  %593 = vmatpush1.msra.mxu0 0.0
  %594 = vmatprep.subr.mxu0 0.0
  %595 = vmatpush1.msra.mxu0 0.0
  %596 = vmatprep.subr.mxu0 0.0
  %597 = vmatpush1.msra.mxu0 0.0
  %598 = vmatprep.subr.mxu0 0.0
  %599 = vmatpush1.msra.mxu0 0.0
  %600 = vmatprep.mubr.f32.mxu0 0.0
  %601 = vmatmul.mubr.f32.gmra.mrb[0].mxu0 %v528
  %v602 = vpop.f32.mrb[0].mxu0
  %v603 = vadd.f32 0.0, %v602
  %v604 = vpop.f32.mrb[0].mxu0
  %605 = vmatprep.mubr.f32.mxu0 0.0
  %606 = vmatmul.mubr.f32.gmra.mrb[0].mxu0 %v531
  %v607 = vpop.f32.mrb[0].mxu0
  %v608 = vadd.f32 0.0, %v607
  %v609 = vpop.f32.mrb[0].mxu0
  %610 = vdwg.mxu0
  %v611 = vadd.f32 %v517, %v603
  %v612 = vadd.f32 %v522, %v608
  %v613 = vld [vmem:[%s3 + $0x30] sm:$0xff]
  %v614 = vld [vmem:[%s3 + $0x38] sm:$0xff]
  %v616 = vsel %vm355, %v613, 0
  %v619 = vsel %vm355, %v614, 0
  %v622 = vsel %vm362, %v349, 0
  %624 = vmatprep.subr.mxu0 0.0
  %625 = vmatpush1.msra.mxu0 %v319
  %626 = vmatprep.subr.mxu0 0.0
  %627 = vmatpush1.msra.mxu0 %v325
  %628 = vmatprep.subr.mxu0 0.0
  %629 = vmatpush1.msra.mxu0 %v331
  %630 = vmatprep.subr.mxu0 0.0
  %631 = vmatpush1.msra.mxu0 %v337
  %632 = vmatprep.subr.mxu0 0.0
  %633 = vmatpush1.msra.mxu0 %v343
  %634 = vmatprep.subr.mxu0 0.0
  %635 = vmatpush1.msra.mxu0 %v622
  %636 = vmatprep.subr.mxu0 0.0
  %637 = vmatpush1.msra.mxu0 0.0
  %638 = vmatprep.subr.mxu0 0.0
  %639 = vmatpush1.msra.mxu0 0.0
  %640 = vmatprep.subr.mxu0 0.0
  %641 = vmatpush1.msra.mxu0 0.0
  %642 = vmatprep.subr.mxu0 0.0
  %643 = vmatpush1.msra.mxu0 0.0
  %644 = vmatprep.subr.mxu0 0.0
  %645 = vmatpush1.msra.mxu0 0.0
  %646 = vmatprep.subr.mxu0 0.0
  %647 = vmatpush1.msra.mxu0 0.0
  %648 = vmatprep.subr.mxu0 0.0
  %649 = vmatpush1.msra.mxu0 0.0
  %650 = vmatprep.subr.mxu0 0.0
  %651 = vmatpush1.msra.mxu0 0.0
  %652 = vmatprep.subr.mxu0 0.0
  %653 = vmatpush1.msra.mxu0 0.0
  %654 = vmatprep.subr.mxu0 0.0
  %655 = vmatpush1.msra.mxu0 0.0
  %656 = vmatprep.subr.mxu0 0.0
  %657 = vmatpush1.msra.mxu0 0.0
  %658 = vmatprep.subr.mxu0 0.0
  %659 = vmatpush1.msra.mxu0 0.0
  %660 = vmatprep.subr.mxu0 0.0
  %661 = vmatpush1.msra.mxu0 0.0
  %662 = vmatprep.subr.mxu0 0.0
  %663 = vmatpush1.msra.mxu0 0.0
  %664 = vmatprep.subr.mxu0 0.0
  %665 = vmatpush1.msra.mxu0 0.0
  %666 = vmatprep.subr.mxu0 0.0
  %667 = vmatpush1.msra.mxu0 0.0
  %668 = vmatprep.subr.mxu0 0.0
  %669 = vmatpush1.msra.mxu0 0.0
  %670 = vmatprep.subr.mxu0 0.0
  %671 = vmatpush1.msra.mxu0 0.0
  %672 = vmatprep.subr.mxu0 0.0
  %673 = vmatpush1.msra.mxu0 0.0
  %674 = vmatprep.subr.mxu0 0.0
  %675 = vmatpush1.msra.mxu0 0.0
  %676 = vmatprep.subr.mxu0 0.0
  %677 = vmatpush1.msra.mxu0 0.0
  %678 = vmatprep.subr.mxu0 0.0
  %679 = vmatpush1.msra.mxu0 0.0
  %680 = vmatprep.subr.mxu0 0.0
  %681 = vmatpush1.msra.mxu0 0.0
  %682 = vmatprep.subr.mxu0 0.0
  %683 = vmatpush1.msra.mxu0 0.0
  %684 = vmatprep.subr.mxu0 0.0
  %685 = vmatpush1.msra.mxu0 0.0
  %686 = vmatprep.subr.mxu0 0.0
  %687 = vmatpush1.msra.mxu0 0.0
  %688 = vmatprep.mubr.f32.mxu0 0.0
  %689 = vmatmul.mubr.f32.gmra.mrb[0].mxu0 %v616
  %v690 = vpop.f32.mrb[0].mxu0
  %v691 = vadd.f32 0.0, %v690
  %v692 = vpop.f32.mrb[0].mxu0
  %693 = vmatprep.mubr.f32.mxu0 0.0
  %694 = vmatmul.mubr.f32.gmra.mrb[0].mxu0 %v619
  %v695 = vpop.f32.mrb[0].mxu0
  %v696 = vadd.f32 0.0, %v695
  %v697 = vpop.f32.mrb[0].mxu0
  %698 = vdwg.mxu0
  %v699 = vadd.f32 %v611, %v691
  %v700 = vadd.f32 %v612, %v696
  %v701 = vld [vmem:[%s3 + $0xd0] sm:$0xff]
  %v702 = vld [vmem:[%s3 + $0xd8] sm:$0xff]
  %704 = vset.pattern.permute.xlu0 0
  %705 = vperm.xlu0 %704, %v701
  %v706 = vpop.permute.xlu0 %705
  %709 = vset.pattern.permute.xlu0 0
  %710 = vperm.xlu0 %709, %v702
  %v711 = vpop.permute.xlu0 %710
  %v713 = vadd.f32 %v699, %v706
  %v714 = vadd.f32 %v700, %v711
  %vm715 = vcmp.gt.f32.partialorder %v713, 0.0
  %vm716 = vcmp.gt.f32.partialorder %v714, 0.0
  %v717 = vmin.f32 %v713, 0.0
  %v718 = vmin.f32 %v714, 0.0
  %v719 = vmul.f32 %v717, 1.442695
  %v720 = vpow.pop %v719
  %v721 = vmul.f32 %v718, 1.442695
  %v722 = vpow.pop %v721
  %v723 = vsub.f32 %v720, 1.0
  %v724 = vsub.f32 %v722, 1.0
  %v725 = vsel %vm715, %v713, %v723
  %v726 = vsel %vm716, %v714, %v724
  %v727 = vld [vmem:[%s3 + $0x40] sm:$0xff]
  %v728 = vld [vmem:[%s3 + $0x48] sm:$0xff]
  %v729 = vld [vmem:[%s3 + $0x50] sm:$0xff]
  %v730 = vld [vmem:[%s3 + $0x58] sm:$0xff]
  %v731 = vld [vmem:[%s3 + $0x60] sm:$0xff]
  %v732 = vld [vmem:[%s3 + $0x68] sm:$0xff]
  %v733 = vld [vmem:[%s3 + $0x70] sm:$0xff]
  %v734 = vld [vmem:[%s3 + $0x78] sm:$0xff]
  %v735 = vld [vmem:[%s3 + $0x80] sm:$0xff]
  %v736 = vld [vmem:[%s3 + $0x88] sm:$0xff]
  %v737 = vld [vmem:[%s3 + $0x90] sm:$0xff]
  %v738 = vld [vmem:[%s3 + $0x98] sm:$0xff]
  %v739 = vld [vmem:[%s3 + $0xa0] sm:$0xff]
  %v740 = vld [vmem:[%s3 + $0xa8] sm:$0xff]
  %v741 = vld [vmem:[%s3 + $0xb0] sm:$0xff]
  %v742 = vld [vmem:[%s3 + $0xb8] sm:$0xff]
  %743 = vmatprep.subr.mxu0 0.0
  %744 = vmatpush1.msra.mxu0 %v727
  %745 = vmatprep.subr.mxu0 0.0
  %746 = vmatpush1.msra.mxu0 %v728
  %747 = vmatprep.subr.mxu0 0.0
  %748 = vmatpush1.msra.mxu0 %v729
  %749 = vmatprep.subr.mxu0 0.0
  %750 = vmatpush1.msra.mxu0 %v730
  %751 = vmatprep.subr.mxu0 0.0
  %752 = vmatpush1.msra.mxu0 %v731
  %753 = vmatprep.subr.mxu0 0.0
  %754 = vmatpush1.msra.mxu0 %v732
  %755 = vmatprep.subr.mxu0 0.0
  %756 = vmatpush1.msra.mxu0 %v733
  %757 = vmatprep.subr.mxu0 0.0
  %758 = vmatpush1.msra.mxu0 %v734
  %759 = vmatprep.subr.mxu0 0.0
  %760 = vmatpush1.msra.mxu0 %v735
  %761 = vmatprep.subr.mxu0 0.0
  %762 = vmatpush1.msra.mxu0 %v736
  %763 = vmatprep.subr.mxu0 0.0
  %764 = vmatpush1.msra.mxu0 %v737
  %765 = vmatprep.subr.mxu0 0.0
  %766 = vmatpush1.msra.mxu0 %v738
  %767 = vmatprep.subr.mxu0 0.0
  %768 = vmatpush1.msra.mxu0 %v739
  %769 = vmatprep.subr.mxu0 0.0
  %770 = vmatpush1.msra.mxu0 %v740
  %771 = vmatprep.subr.mxu0 0.0
  %772 = vmatpush1.msra.mxu0 %v741
  %773 = vmatprep.subr.mxu0 0.0
  %774 = vmatpush1.msra.mxu0 %v742
  %775 = vmatprep.subr.mxu0 0.0
  %776 = vmatpush1.msra.mxu0 0.0
  %777 = vmatprep.subr.mxu0 0.0
  %778 = vmatpush1.msra.mxu0 0.0
  %779 = vmatprep.subr.mxu0 0.0
  %780 = vmatpush1.msra.mxu0 0.0
  %781 = vmatprep.subr.mxu0 0.0
  %782 = vmatpush1.msra.mxu0 0.0
  %783 = vmatprep.subr.mxu0 0.0
  %784 = vmatpush1.msra.mxu0 0.0
  %785 = vmatprep.subr.mxu0 0.0
  %786 = vmatpush1.msra.mxu0 0.0
  %787 = vmatprep.subr.mxu0 0.0
  %788 = vmatpush1.msra.mxu0 0.0
  %789 = vmatprep.subr.mxu0 0.0
  %790 = vmatpush1.msra.mxu0 0.0
  %791 = vmatprep.subr.mxu0 0.0
  %792 = vmatpush1.msra.mxu0 0.0
  %793 = vmatprep.subr.mxu0 0.0
  %794 = vmatpush1.msra.mxu0 0.0
  %795 = vmatprep.subr.mxu0 0.0
  %796 = vmatpush1.msra.mxu0 0.0
  %797 = vmatprep.subr.mxu0 0.0
  %798 = vmatpush1.msra.mxu0 0.0
  %799 = vmatprep.subr.mxu0 0.0
  %800 = vmatpush1.msra.mxu0 0.0
  %801 = vmatprep.subr.mxu0 0.0
  %802 = vmatpush1.msra.mxu0 0.0
  %803 = vmatprep.subr.mxu0 0.0
  %804 = vmatpush1.msra.mxu0 0.0
  %805 = vmatprep.subr.mxu0 0.0
  %806 = vmatpush1.msra.mxu0 0.0
  %807 = vmatprep.mubr.f32.mxu0 0.0
  %808 = vmatmul.mubr.f32.gmra.mrb[0].mxu0 %v725
  %v809 = vpop.f32.mrb[0].mxu0
  %v810 = vadd.f32 0.0, %v809
  %v811 = vpop.f32.mrb[0].mxu0
  %812 = vmatprep.mubr.f32.mxu0 0.0
  %813 = vmatmul.mubr.f32.gmra.mrb[0].mxu0 %v726
  %v814 = vpop.f32.mrb[0].mxu0
  %v815 = vadd.f32 0.0, %v814
  %v816 = vpop.f32.mrb[0].mxu0
  %817 = vdwg.mxu0
  %820 = vrot.lane.b32.xlu0 %v810, 127
  %v821 = vpop.permute.xlu0 %820
  %822 = vrot.lane.b32.xlu0 %v815, 127
  %v823 = vpop.permute.xlu0 %822
  %826 = vrot.lane.b32.xlu0 %v810, 126
  %v827 = vpop.permute.xlu0 %826
  %828 = vrot.lane.b32.xlu0 %v815, 126
  %v829 = vpop.permute.xlu0 %828
  %832 = vrot.lane.b32.xlu0 %v810, 125
  %v833 = vpop.permute.xlu0 %832
  %834 = vrot.lane.b32.xlu0 %v815, 125
  %v835 = vpop.permute.xlu0 %834
  %838 = vrot.lane.b32.xlu0 %v810, 124
  %v839 = vpop.permute.xlu0 %838
  %840 = vrot.lane.b32.xlu0 %v815, 124
  %v841 = vpop.permute.xlu0 %840
  %844 = vrot.lane.b32.xlu0 %v810, 123
  %v845 = vpop.permute.xlu0 %844
  %846 = vrot.lane.b32.xlu0 %v815, 123
  %v847 = vpop.permute.xlu0 %846
  %850 = vrot.lane.b32.xlu0 %v810, 122
  %v851 = vpop.permute.xlu0 %850
  %852 = vrot.lane.b32.xlu0 %v815, 122
  %v853 = vpop.permute.xlu0 %852
  %856 = vrot.lane.b32.xlu0 %v810, 121
  %v857 = vpop.permute.xlu0 %856
  %858 = vrot.lane.b32.xlu0 %v815, 121
  %v859 = vpop.permute.xlu0 %858
  %862 = vrot.lane.b32.xlu0 %v810, 120
  %v863 = vpop.permute.xlu0 %862
  %864 = vrot.lane.b32.xlu0 %v815, 120
  %v865 = vpop.permute.xlu0 %864
  %868 = vrot.lane.b32.xlu0 %v810, 119
  %v869 = vpop.permute.xlu0 %868
  %870 = vrot.lane.b32.xlu0 %v815, 119
  %v871 = vpop.permute.xlu0 %870
  %874 = vrot.lane.b32.xlu0 %v810, 118
  %v875 = vpop.permute.xlu0 %874
  %876 = vrot.lane.b32.xlu0 %v815, 118
  %v877 = vpop.permute.xlu0 %876
  %880 = vrot.lane.b32.xlu0 %v810, 117
  %v881 = vpop.permute.xlu0 %880
  %882 = vrot.lane.b32.xlu0 %v815, 117
  %v883 = vpop.permute.xlu0 %882
  %886 = vrot.lane.b32.xlu0 %v810, 116
  %v887 = vpop.permute.xlu0 %886
  %888 = vrot.lane.b32.xlu0 %v815, 116
  %v889 = vpop.permute.xlu0 %888
  %892 = vrot.lane.b32.xlu0 %v810, 115
  %v893 = vpop.permute.xlu0 %892
  %894 = vrot.lane.b32.xlu0 %v815, 115
  %v895 = vpop.permute.xlu0 %894
  %898 = vrot.lane.b32.xlu0 %v810, 114
  %v899 = vpop.permute.xlu0 %898
  %900 = vrot.lane.b32.xlu0 %v815, 114
  %v901 = vpop.permute.xlu0 %900
  %904 = vrot.lane.b32.xlu0 %v810, 113
  %v905 = vpop.permute.xlu0 %904
  %906 = vrot.lane.b32.xlu0 %v815, 113
  %v907 = vpop.permute.xlu0 %906
  %v910 = vld [vmem:[%s2] sm:$0xff]
  %v911 = vld [vmem:[%s2 + $0x8] sm:$0xff]
  %v912 = vld [vmem:[%s2 + $0x10] sm:$0xff]
  %v913 = vld [vmem:[%s2 + $0x18] sm:$0xff]
  %914 = vset.pattern.permute.xlu0 1
  %915 = vperm.xlu0 %914, %v701
  %v916 = vpop.permute.xlu0 %915
  %918 = vset.pattern.permute.xlu0 1
  %919 = vperm.xlu0 %918, %v702
  %v920 = vpop.permute.xlu0 %919
  %922 = vmatprep.subr.mxu0 0.0
  %923 = vmatpush1.msra.mxu0 %v810
  %924 = vmatprep.subr.mxu0 0.0
  %925 = vmatpush1.msra.mxu0 %v815
  %926 = vmatprep.subr.mxu0 0.0
  %927 = vmatpush1.msra.mxu0 %v821
  %928 = vmatprep.subr.mxu0 0.0
  %929 = vmatpush1.msra.mxu0 %v823
  %930 = vmatprep.subr.mxu0 0.0
  %931 = vmatpush1.msra.mxu0 %v827
  %932 = vmatprep.subr.mxu0 0.0
  %933 = vmatpush1.msra.mxu0 %v829
  %934 = vmatprep.subr.mxu0 0.0
  %935 = vmatpush1.msra.mxu0 %v833
  %936 = vmatprep.subr.mxu0 0.0
  %937 = vmatpush1.msra.mxu0 %v835
  %938 = vmatprep.subr.mxu0 0.0
  %939 = vmatpush1.msra.mxu0 %v839
  %940 = vmatprep.subr.mxu0 0.0
  %941 = vmatpush1.msra.mxu0 %v841
  %942 = vmatprep.subr.mxu0 0.0
  %943 = vmatpush1.msra.mxu0 %v845
  %944 = vmatprep.subr.mxu0 0.0
  %945 = vmatpush1.msra.mxu0 %v847
  %946 = vmatprep.subr.mxu0 0.0
  %947 = vmatpush1.msra.mxu0 %v851
  %948 = vmatprep.subr.mxu0 0.0
  %949 = vmatpush1.msra.mxu0 %v853
  %950 = vmatprep.subr.mxu0 0.0
  %951 = vmatpush1.msra.mxu0 %v857
  %952 = vmatprep.subr.mxu0 0.0
  %953 = vmatpush1.msra.mxu0 %v859
  %954 = vmatprep.subr.mxu0 0.0
  %955 = vmatpush1.msra.mxu0 %v863
  %956 = vmatprep.subr.mxu0 0.0
  %957 = vmatpush1.msra.mxu0 %v865
  %958 = vmatprep.subr.mxu0 0.0
  %959 = vmatpush1.msra.mxu0 %v869
  %960 = vmatprep.subr.mxu0 0.0
  %961 = vmatpush1.msra.mxu0 %v871
  %962 = vmatprep.subr.mxu0 0.0
  %963 = vmatpush1.msra.mxu0 %v875
  %964 = vmatprep.subr.mxu0 0.0
  %965 = vmatpush1.msra.mxu0 %v877
  %966 = vmatprep.subr.mxu0 0.0
  %967 = vmatpush1.msra.mxu0 %v881
  %968 = vmatprep.subr.mxu0 0.0
  %969 = vmatpush1.msra.mxu0 %v883
  %970 = vmatprep.subr.mxu0 0.0
  %971 = vmatpush1.msra.mxu0 %v887
  %972 = vmatprep.subr.mxu0 0.0
  %973 = vmatpush1.msra.mxu0 %v889
  %974 = vmatprep.subr.mxu0 0.0
  %975 = vmatpush1.msra.mxu0 %v893
  %976 = vmatprep.subr.mxu0 0.0
  %977 = vmatpush1.msra.mxu0 %v895
  %978 = vmatprep.subr.mxu0 0.0
  %979 = vmatpush1.msra.mxu0 %v899
  %980 = vmatprep.subr.mxu0 0.0
  %981 = vmatpush1.msra.mxu0 %v901
  %982 = vmatprep.subr.mxu0 0.0
  %983 = vmatpush1.msra.mxu0 %v905
  %984 = vmatprep.subr.mxu0 0.0
  %985 = vmatpush1.msra.mxu0 %v907
  %986 = vmatprep.mubr.f32.mxu0 %v911
  %987 = vmatmul.mubr.f32.gmra.mrb[0].mxu0 %v910
  %v988 = vpop.f32.mrb[0].mxu0
  %v989 = vadd.f32 %v916, %v988
  %v990 = vpop.f32.mrb[0].mxu0
  %991 = vmatprep.mubr.f32.mxu0 %v913
  %992 = vmatmul.mubr.f32.gmra.mrb[0].mxu0 %v912
  %v993 = vpop.f32.mrb[0].mxu0
  %v994 = vadd.f32 %v920, %v993
  %v995 = vpop.f32.mrb[0].mxu0
  %996 = vdwg.mxu0
  %vm997 = vcmp.gt.f32.partialorder %v989, 0.0
  %vm998 = vcmp.gt.f32.partialorder %v994, 0.0
  %v999 = vmin.f32 %v989, 0.0
  %v1000 = vmin.f32 %v994, 0.0
  %v1001 = vmul.f32 %v999, 1.442695
  %v1002 = vpow.pop %v1001
  %v1003 = vmul.f32 %v1000, 1.442695
  %v1004 = vpow.pop %v1003
  %v1005 = vsub.f32 %v1002, 1.0
  %v1006 = vsub.f32 %v1004, 1.0
  %v1007 = vsel %vm997, %v989, %v1005
  %v1008 = vsel %vm998, %v994, %v1006
  %v1009 = vld [vmem:[%s3 + $0xc0] sm:$0xff]
  %v1010 = vld [vmem:[%s3 + $0xc8] sm:$0x3f]
  %vm1011 = vcmask 113664
  %v1013 = vsel %vm1011, %v1007, 0
  %v1016 = vsel %vm1011, %v1008, 0
  %vm1018 = vcmask 1045504
  %v1020 = vsel %vm1018, %v1010, 0
  %1022 = vmatprep.subr.mxu0 0.0
  %1023 = vmatpush1.msra.mxu0 %v1009
  %1024 = vmatprep.subr.mxu0 0.0
  %1025 = vmatpush1.msra.mxu0 %v1020
  %1026 = vmatprep.subr.mxu0 0.0
  %1027 = vmatpush1.msra.mxu0 0.0
  %1028 = vmatprep.subr.mxu0 0.0
  %1029 = vmatpush1.msra.mxu0 0.0
  %1030 = vmatprep.subr.mxu0 0.0
  %1031 = vmatpush1.msra.mxu0 0.0
  %1032 = vmatprep.subr.mxu0 0.0
  %1033 = vmatpush1.msra.mxu0 0.0
  %1034 = vmatprep.subr.mxu0 0.0
  %1035 = vmatpush1.msra.mxu0 0.0
  %1036 = vmatprep.subr.mxu0 0.0
  %1037 = vmatpush1.msra.mxu0 0.0
  %1038 = vmatprep.subr.mxu0 0.0
  %1039 = vmatpush1.msra.mxu0 0.0
  %1040 = vmatprep.subr.mxu0 0.0
  %1041 = vmatpush1.msra.mxu0 0.0
  %1042 = vmatprep.subr.mxu0 0.0
  %1043 = vmatpush1.msra.mxu0 0.0
  %1044 = vmatprep.subr.mxu0 0.0
  %1045 = vmatpush1.msra.mxu0 0.0
  %1046 = vmatprep.subr.mxu0 0.0
  %1047 = vmatpush1.msra.mxu0 0.0
  %1048 = vmatprep.subr.mxu0 0.0
  %1049 = vmatpush1.msra.mxu0 0.0
  %1050 = vmatprep.subr.mxu0 0.0
  %1051 = vmatpush1.msra.mxu0 0.0
  %1052 = vmatprep.subr.mxu0 0.0
  %1053 = vmatpush1.msra.mxu0 0.0
  %1054 = vmatprep.subr.mxu0 0.0
  %1055 = vmatpush1.msra.mxu0 0.0
  %1056 = vmatprep.subr.mxu0 0.0
  %1057 = vmatpush1.msra.mxu0 0.0
  %1058 = vmatprep.subr.mxu0 0.0
  %1059 = vmatpush1.msra.mxu0 0.0
  %1060 = vmatprep.subr.mxu0 0.0
  %1061 = vmatpush1.msra.mxu0 0.0
  %1062 = vmatprep.subr.mxu0 0.0
  %1063 = vmatpush1.msra.mxu0 0.0
  %1064 = vmatprep.subr.mxu0 0.0
  %1065 = vmatpush1.msra.mxu0 0.0
  %1066 = vmatprep.subr.mxu0 0.0
  %1067 = vmatpush1.msra.mxu0 0.0
  %1068 = vmatprep.subr.mxu0 0.0
  %1069 = vmatpush1.msra.mxu0 0.0
  %1070 = vmatprep.subr.mxu0 0.0
  %1071 = vmatpush1.msra.mxu0 0.0
  %1072 = vmatprep.subr.mxu0 0.0
  %1073 = vmatpush1.msra.mxu0 0.0
  %1074 = vmatprep.subr.mxu0 0.0
  %1075 = vmatpush1.msra.mxu0 0.0
  %1076 = vmatprep.subr.mxu0 0.0
  %1077 = vmatpush1.msra.mxu0 0.0
  %1078 = vmatprep.subr.mxu0 0.0
  %1079 = vmatpush1.msra.mxu0 0.0
  %1080 = vmatprep.subr.mxu0 0.0
  %1081 = vmatpush1.msra.mxu0 0.0
  %1082 = vmatprep.subr.mxu0 0.0
  %1083 = vmatpush1.msra.mxu0 0.0
  %1084 = vmatprep.subr.mxu0 0.0
  %1085 = vmatpush1.msra.mxu0 0.0
  %1086 = vmatprep.mubr.f32.mxu0 0.0
  %1087 = vmatmul.mubr.f32.gmra.mrb[0].mxu0 %v1013
  %v1088 = vpop.f32.mrb[0].mxu0
  %v1089 = vadd.f32 0.0, %v1088
  %v1090 = vpop.f32.mrb[0].mxu0
  %1091 = vmatprep.mubr.f32.mxu0 0.0
  %1092 = vmatmul.mubr.f32.gmra.mrb[0].mxu0 %v1016
  %v1093 = vpop.f32.mrb[0].mxu0
  %v1094 = vadd.f32 0.0, %v1093
  %v1095 = vpop.f32.mrb[0].mxu0
  %1096 = vdwg.mxu0
  %vm1097 = vcmask 15360
  %1098 = vst.msk [vmem:[%s4] sm:$0xff] %vm1097, %v1089
  %1099 = vst.msk [vmem:[%s4 + $0x8] sm:$0xff] %vm1097, %v1094
  // Predicated region
  $region18: #{conv_module_forward.1} parent=0 // pred_check
    _
  $region19: #{conv_module_forward.1} parent=0 // pred_check_branch
    %1101 = sbr.rel (0) target = $region21
  $region20: #{conv_module_forward.1} parent=0 // pred_region
    _
  $region21: #{conv_module_forward.1} parent=0 // pred_fallthru
    _
  // Predicated region
  $region22: #{conv_module_forward.1} parent=0 // pred_check
    _
  $region23: #{conv_module_forward.1} parent=0 // pred_check_branch
    %1103 = sbr.rel (0) target = $region25
  $region24: #{conv_module_forward.1} parent=0 // pred_region
    _
  $region25: #{conv_module_forward.1} parent=0 // pred_fallthru
    _

</llo_original>
